<compile_context>
chip_gen: v7x
topology: tpu7x:2x2x1
jax: 0.10.0
libtpu: 0.0.40
codegen_flags: <defaults>
</compile_context>

<pallas_src>
import jax
import jax.numpy as jnp
from jax import lax
from jax.experimental import pallas as pl
from jax.experimental.pallas import tpu as pltpu


def cox_loss_kernel(expr_row_ref, risk_ref, ev_ref, term_ref):
    """One (1, TILE) column-tile of per-sample Cox partial-likelihood terms.

    expr_row_ref: (1, P)    exp(risk) in descending-time order (padded with 0)
    risk_ref:     (1, TILE) risk scores, sorted order
    ev_ref:       (1, TILE) event indicators (1.0 / 0.0), sorted order
    term_ref:     (1, TILE) output: (risk_i - log(cumsum_exp_i + eps)) * ev_i
    """
    i = pl.program_id(0)
    P = expr_row_ref.shape[1]
    tile = term_ref.shape[1]

    # tri[j, c] = 1.0 iff sorted position j is at-or-before global column
    # i*tile + c  (i.e. j is in the risk set of sample i*tile + c).
    j_idx = lax.broadcasted_iota(jnp.int32, (P, tile), 0)          # sublane = j
    c_idx = lax.broadcasted_iota(jnp.int32, (1, tile), 1) + i * tile  # lane = i
    tri = jnp.where(j_idx <= c_idx, 1.0, 0.0)                      # (P, tile)

    # denom[c] = sum_{j <= c} exp(risk_j); lane-dense (1,P) x (P,TILE) on the
    # MXU with pinned f32 precision (feeds a log, so bf16 passes are not ok).
    denom = jnp.dot(expr_row_ref[...], tri,
                    preferred_element_type=jnp.float32,
                    precision=jax.lax.Precision.HIGHEST)           # (1, tile)

    term_ref[...] = (risk_ref[...] - jnp.log(denom + 1e-8)) * ev_ref[...]


def _pick_tile(P):
    """Largest lane-tile with >=2 grid steps and a (P, tile) mask <= ~4 MiB."""
    for cand in (512, 256):
        if P % cand == 0 and P // cand >= 2 and P * cand * 4 <= 4 * 1024 * 1024:
            return cand
    return 128


def cox_loss(risk_scores, events, times):
    """JAX/Pallas equivalent of CoxLoss.forward."""
    risk = jnp.reshape(risk_scores, (-1,)).astype(jnp.float32)
    events = jnp.reshape(events, (-1,)).astype(jnp.float32)
    times = jnp.reshape(times, (-1,)).astype(jnp.float32)
    n = risk.shape[0]
    if n == 1:
        # PyTorch path: batch_size == 1 -> |risk_scores[0]|
        return jnp.abs(risk[0])

    # Descending-time order (stable); work entirely in sorted order so the
    # denominator is a plain prefix sum (triangular mask in the kernel).
    order = jnp.argsort(-times)
    s_risk = risk[order]
    s_ev = jnp.where(events[order] == 1.0, 1.0, 0.0)
    s_expr = jnp.exp(s_risk)

    P = max(128, ((n + 127) // 128) * 128)
    tile_i = _pick_tile(P)
    num_tiles = P // tile_i
    pad = P - n

    def row(x):
        # Zero padding: padded j never enters a real risk set (j <= i fails),
        # padded columns have event = 0 so their terms vanish.
        return jnp.pad(x, (0, pad)).reshape(1, P)

    expr_row = row(s_expr)
    risk_row = row(s_risk)
    ev_row = row(s_ev)

    terms = pl.pallas_call(
        cox_loss_kernel,
        out_shape=jax.ShapeDtypeStruct((1, P), jnp.float32),
        grid=(num_tiles,),
        in_specs=[
            pl.BlockSpec((1, P), lambda i: (0, 0)),        # exp(risk) full row
            pl.BlockSpec((1, tile_i), lambda i: (0, i)),   # sorted risk tile
            pl.BlockSpec((1, tile_i), lambda i: (0, i)),   # sorted events tile
        ],
        out_specs=pl.BlockSpec((1, tile_i), lambda i: (0, i)),
        compiler_params=pltpu.CompilerParams(
            dimension_semantics=("parallel",),
            vmem_limit_bytes=32 * 1024 * 1024,
        ),
    )(expr_row, risk_row, ev_row)

    n_ev = jnp.sum(s_ev)
    total = jnp.sum(terms)
    return jnp.where(n_ev > 0.0, -total / n_ev, 0.0)


def cox_loss_ref(risk_scores, events, times):
    """Pure-JAX reference mirroring the PyTorch code (sort + cumsum)."""
    risk_scores = jnp.reshape(risk_scores, (-1,)).astype(jnp.float32)
    events = jnp.reshape(events, (-1,)).astype(jnp.float32)
    times = jnp.reshape(times, (-1,)).astype(jnp.float32)
    order = jnp.argsort(-times)
    sr = risk_scores[order]
    se = events[order]
    cumsum_risk = jnp.cumsum(jnp.exp(sr))
    mask = (se == 1.0).astype(jnp.float32)
    term = (sr - jnp.log(cumsum_risk + 1e-8)) * mask
    n_ev = jnp.sum(mask)
    return jnp.where(n_ev > 0.0, -jnp.sum(term) / n_ev, 0.0)


if __name__ == "__main__":
    key = jax.random.PRNGKey(0)
    k1, k2, k3 = jax.random.split(key, 3)

    # Small case (single lane tile, P = 128).
    N = 8
    risk_scores = jax.random.normal(k1, (N, 1), dtype=jnp.float32)   # [batch, 1]
    events = (jax.random.uniform(k2, (N,)) > 0.4).astype(jnp.float32)
    times = jax.random.uniform(k3, (N,), minval=0.1, maxval=10.0)

    loss = jax.block_until_ready(cox_loss(risk_scores, events, times))
    ref = cox_loss_ref(risk_scores, events, times)
    assert jnp.allclose(loss, ref, atol=1e-4, rtol=1e-4), (loss, ref)

    # Larger case exercising the multi-tile grid (P = 384, three lane tiles).
    k4, k5, k6 = jax.random.split(jax.random.PRNGKey(1), 3)
    N2 = 300
    risk2 = jax.random.normal(k4, (N2, 1), dtype=jnp.float32)
    events2 = (jax.random.uniform(k5, (N2,)) > 0.4).astype(jnp.float32)
    times2 = jax.random.uniform(k6, (N2,), minval=0.1, maxval=10.0)

    loss2 = jax.block_until_ready(cox_loss(risk2, events2, times2))
    ref2 = cox_loss_ref(risk2, events2, times2)
    assert jnp.allclose(loss2, ref2, atol=1e-4, rtol=1e-4), (loss2, ref2)

    # batch_size == 1 path (no kernel; matches torch.abs(risk_scores[0])).
    l1 = jax.block_until_ready(
        cox_loss(jnp.array([[-1.5]], jnp.float32),
                 jnp.array([1.0], jnp.float32),
                 jnp.array([2.0], jnp.float32)))
    assert jnp.allclose(l1, 1.5), l1

    print("KERNEL_OK")
</pallas_src>

<mosaic_0001>
module attributes {stable_mosaic.version = 11 : i64} {
  func.func @cox_loss_kernel(%arg0: i32, %arg1: memref<1x128xf32, #tpu.memory_space<vmem>>, %arg2: memref<1x128xf32, #tpu.memory_space<vmem>>, %arg3: memref<1x128xf32, #tpu.memory_space<vmem>>, %arg4: memref<1x128xf32, #tpu.memory_space<vmem>>) attributes {dimension_semantics = [#tpu.dimension_semantics<parallel>], iteration_bounds = array<i64: 1>, scalar_prefetch = 0 : i64, scratch_operands = 0 : i64, tpu.core_type = #tpu.core_type<tc>, window_params = [{pipeline_mode = #tpu.pipeline_mode<synchronous>, transform_indices = @transform_0, window_bounds = array<i64: 1, 128>}, {transform_indices = @transform_1, window_bounds = array<i64: 1, 128>}, {transform_indices = @transform_2, window_bounds = array<i64: 1, 128>}, {transform_indices = @transform_3, window_bounds = array<i64: 1, 128>}]} {
    %0 = tpu.iota {dimensions = array<i32: 0>} : vector<128x128xi32>
    %1 = tpu.iota {dimensions = array<i32: 1>} : vector<1x128xi32>
    %c128_i32 = arith.constant 128 : i32
    %2 = arith.muli %arg0, %c128_i32 : i32
    %3 = vector.broadcast %2 : i32 to vector<1x128xi32>
    %4 = arith.addi %1, %3 : vector<1x128xi32>
    %5 = vector.broadcast %4 : vector<1x128xi32> to vector<128x128xi32>
    %6 = arith.cmpi sle, %0, %5 : vector<128x128xi32>
    %cst = arith.constant 1.000000e+00 : f32
    %cst_0 = arith.constant 0.000000e+00 : f32
    %7 = vector.broadcast %cst : f32 to vector<128x128xf32>
    %8 = vector.broadcast %cst_0 : f32 to vector<128x128xf32>
    %9 = arith.select %6, %7, %8 : vector<128x128xi1>, vector<128x128xf32>
    %c0 = arith.constant 0 : index
    %c0_1 = arith.constant 0 : index
    %10 = vector.load %arg1[%c0, %c0_1] : memref<1x128xf32, #tpu.memory_space<vmem>>, vector<1x128xf32>
    %cst_2 = arith.constant dense<0.000000e+00> : vector<1x128xf32>
    %11 = tpu.matmul %10, %9, %cst_2 {dimension_numbers = #tpu.dot_dimension_numbers<[1], [0], [0], [1], [0, 0, 1, 1], [], []>, precision = #tpu.contract_precision<fp32>} : vector<1x128xf32>, vector<128x128xf32>, vector<1x128xf32> -> vector<1x128xf32>
    %c0_3 = arith.constant 0 : index
    %c0_4 = arith.constant 0 : index
    %12 = vector.load %arg2[%c0_3, %c0_4] : memref<1x128xf32, #tpu.memory_space<vmem>>, vector<1x128xf32>
    %cst_5 = arith.constant 9.99999993E-9 : f32
    %13 = vector.broadcast %cst_5 : f32 to vector<1x128xf32>
    %14 = arith.addf %11, %13 : vector<1x128xf32>
    %15 = math.log %14 : vector<1x128xf32>
    %16 = arith.subf %12, %15 : vector<1x128xf32>
    %c0_6 = arith.constant 0 : index
    %c0_7 = arith.constant 0 : index
    %17 = vector.load %arg3[%c0_6, %c0_7] : memref<1x128xf32, #tpu.memory_space<vmem>>, vector<1x128xf32>
    %18 = arith.mulf %16, %17 : vector<1x128xf32>
    %c0_8 = arith.constant 0 : index
    %c0_9 = arith.constant 0 : index
    %19 = vector.load %arg4[%c0_8, %c0_9] : memref<1x128xf32, #tpu.memory_space<vmem>>, vector<1x128xf32>
    tpu.vector_store %arg4[%c0_8, %c0_9], %18 {strides = array<i32>} : memref<1x128xf32, #tpu.memory_space<vmem>>, vector<1x128xf32>,
    return
  }
  func.func @transform_0(%arg0: i32) -> (i32, i32) {
    %c0_i32 = arith.constant 0 : i32
    %c0_i32_0 = arith.constant 0 : i32
    %c0_i32_1 = arith.constant 0 : i32
    return %c0_i32, %c0_i32_0 : i32, i32
  }
  func.func @transform_1(%arg0: i32) -> (i32, i32) {
    %c0_i32 = arith.constant 0 : i32
    %c0_i32_0 = arith.constant 0 : i32
    return %c0_i32, %arg0 : i32, i32
  }
  func.func @transform_2(%arg0: i32) -> (i32, i32) {
    %c0_i32 = arith.constant 0 : i32
    %c0_i32_0 = arith.constant 0 : i32
    return %c0_i32, %arg0 : i32, i32
  }
  func.func @transform_3(%arg0: i32) -> (i32, i32) {
    %c0_i32 = arith.constant 0 : i32
    %c0_i32_0 = arith.constant 0 : i32
    return %c0_i32, %arg0 : i32, i32
  }
}

</mosaic_0001>

<llo_original>
// kernel: tpu_custom_call.1
$region0: #{tpu_custom_call.1}
  #allocation0 [shape = 'u32[]', space=smem, size = 0x4, offset = 0x4, fixed_abs, tag = 'smem constant byte address 0x4 - core index']
  #allocation1 [shape = 'u32[144,128]{1,0:T(1,128)}', space=vmem, size = 0x12000, scoped, tag = 'internal scratch']
  %s0 = inlined_call_operand.hbm [shape: f32[1,128], index: 0, kind: input, shape index: {}]
  %s1 = inlined_call_operand.vmem [shape: f32[1,128], index: 1, kind: input, shape index: {}]
  %s2 = inlined_call_operand.vmem [shape: f32[1,128], index: 2, kind: input, shape index: {}]
  %s3 = inlined_call_operand.hbm [shape: f32[1,128], index: 3, kind: output, shape index: {}]
  %s4 = sld [smem:[#allocation0]]
  $region26: #{tpu_custom_call.1} parent=0
    _
  %s6 = ssub.s32 1, %s4
  %s7 = scalar_select 0, %s6, %s4
  $region1: #{tpu_custom_call.1} parent=0
    #allocation2 [shape = 'u8[512]{0}', space=vmem, size = 0x400, scoped, tag = 'input window, operand 0, single buffered']
    #allocation3 [shape = 's32[1]{0}', space=sflag, size = 0x4, scoped, tag = 'scoped memory for tpu_custom_call.1']
    #allocation4 [shape = 's32[1]{0}', space=sflag, size = 0x4, scoped, tag = 'scoped memory for tpu_custom_call.1']
    #allocation5 [shape = 'u8[512]{0}', space=vmem, size = 0x400, scoped, tag = 'output window, operand 0, single buffered']
    %8 = vsyncpa [#allocation3], 0
    %9 = vsyncpa [#allocation4], 0
    // Predicated region
    $region2: #{tpu_custom_call.1} parent=1 // pred_check
      _
    $region3: #{tpu_custom_call.1} parent=1 // pred_check_branch
      %11 = sbr.rel (0) target = $region5
    $region4: #{tpu_custom_call.1} parent=1 // pred_region
      %s13 = ssub.s32 16, 16
      %14 = vsyncadd [#allocation3], %s13
      %s16 = sshll.u32 [#allocation2], 4
      %s17 = int_to_ptr.vmem [resolvable:$true] %s16
      %19 = dma.hbm_to_vmem [thread:$0]  %s0, 16, %s17, [#allocation3]
    $region5: #{tpu_custom_call.1} parent=1 // pred_fallthru
      _
    // Predicated region
    $region6: #{tpu_custom_call.1} parent=1 // pred_check
      _
    $region7: #{tpu_custom_call.1} parent=1 // pred_check_branch
      %21 = sbr.rel (0) target = $region9
    $region8: #{tpu_custom_call.1} parent=1 // pred_region
      _
    $region9: #{tpu_custom_call.1} parent=1 // pred_fallthru
      _
    // Predicated region
    $region10: #{tpu_custom_call.1} parent=1 // pred_check
      _
    $region11: #{tpu_custom_call.1} parent=1 // pred_check_branch
      %23 = sbr.rel (0) target = $region13
    $region12: #{tpu_custom_call.1} parent=1 // pred_region
      _
    $region13: #{tpu_custom_call.1} parent=1 // pred_fallthru
      _
    // Predicated region
    $region14: #{tpu_custom_call.1} parent=1 // pred_check
      _
    $region15: #{tpu_custom_call.1} parent=1 // pred_check_branch
      %25 = sbr.rel (0) target = $region17
    $region16: #{tpu_custom_call.1} parent=1 // pred_region
      %26 = dma.done [#allocation3], 16
    $region17: #{tpu_custom_call.1} parent=1 // pred_fallthru
      _
    %v27 = vlaneseq
    %v28 = vshrl.u32 %v27, 7
    %v29 = vadd.s32 %v28, 8
    %v30 = vadd.s32 %v28, 16
    %v31 = vadd.s32 %v28, 24
    %v32 = vadd.s32 %v28, 32
    %v33 = vadd.s32 %v28, 40
    %v34 = vadd.s32 %v28, 48
    %v35 = vadd.s32 %v28, 56
    %v36 = vadd.s32 %v28, 64
    %v37 = vadd.s32 %v28, 72
    %v38 = vadd.s32 %v28, 80
    %v39 = vadd.s32 %v28, 88
    %v40 = vadd.s32 %v28, 96
    %v41 = vadd.s32 %v28, 104
    %v42 = vadd.s32 %v28, 112
    %v43 = vadd.s32 %v28, 120
    %v44 = vlaneseq
    %v45 = vand.u32 %v44, 127
    %s46 = smul.u32 0, 128
    %v47 = vstv %s46
    %v48 = vadd.s32 %v45, %v47
    %vm49 = vcmp.le.s32.totalorder %v28, %v48
    %vm50 = vcmp.le.s32.totalorder %v29, %v48
    %vm51 = vcmp.le.s32.totalorder %v30, %v48
    %vm52 = vcmp.le.s32.totalorder %v31, %v48
    %vm53 = vcmp.le.s32.totalorder %v32, %v48
    %vm54 = vcmp.le.s32.totalorder %v33, %v48
    %vm55 = vcmp.le.s32.totalorder %v34, %v48
    %vm56 = vcmp.le.s32.totalorder %v35, %v48
    %vm57 = vcmp.le.s32.totalorder %v36, %v48
    %vm58 = vcmp.le.s32.totalorder %v37, %v48
    %vm59 = vcmp.le.s32.totalorder %v38, %v48
    %vm60 = vcmp.le.s32.totalorder %v39, %v48
    %vm61 = vcmp.le.s32.totalorder %v40, %v48
    %vm62 = vcmp.le.s32.totalorder %v41, %v48
    %vm63 = vcmp.le.s32.totalorder %v42, %v48
    %vm64 = vcmp.le.s32.totalorder %v43, %v48
    %v65 = vsel %vm49, 1.0, 0.0
    %v66 = vsel %vm50, 1.0, 0.0
    %v67 = vsel %vm51, 1.0, 0.0
    %v68 = vsel %vm52, 1.0, 0.0
    %v69 = vsel %vm53, 1.0, 0.0
    %v70 = vsel %vm54, 1.0, 0.0
    %v71 = vsel %vm55, 1.0, 0.0
    %v72 = vsel %vm56, 1.0, 0.0
    %v73 = vsel %vm57, 1.0, 0.0
    %v74 = vsel %vm58, 1.0, 0.0
    %v75 = vsel %vm59, 1.0, 0.0
    %v76 = vsel %vm60, 1.0, 0.0
    %v77 = vsel %vm61, 1.0, 0.0
    %v78 = vsel %vm62, 1.0, 0.0
    %v79 = vsel %vm63, 1.0, 0.0
    %v80 = vsel %vm64, 1.0, 0.0
    %v81 = vld [vmem:[#allocation2] sm:$0x1]
    %v82 = vld [vmem:[%s1] sm:$0x1]
    %83 = vmatprep.subr.mxu0 0.0
    %84 = vmatpush1.msra.mxu0 %v65
    %85 = vmatprep.subr.mxu0 0.0
    %86 = vmatpush1.msra.mxu0 %v66
    %87 = vmatprep.subr.mxu0 0.0
    %88 = vmatpush1.msra.mxu0 %v67
    %89 = vmatprep.subr.mxu0 0.0
    %90 = vmatpush1.msra.mxu0 %v68
    %91 = vmatprep.subr.mxu0 0.0
    %92 = vmatpush1.msra.mxu0 %v69
    %93 = vmatprep.subr.mxu0 0.0
    %94 = vmatpush1.msra.mxu0 %v70
    %95 = vmatprep.subr.mxu0 0.0
    %96 = vmatpush1.msra.mxu0 %v71
    %97 = vmatprep.subr.mxu0 0.0
    %98 = vmatpush1.msra.mxu0 %v72
    %99 = vmatprep.subr.mxu0 0.0
    %100 = vmatpush1.msra.mxu0 %v73
    %101 = vmatprep.subr.mxu0 0.0
    %102 = vmatpush1.msra.mxu0 %v74
    %103 = vmatprep.subr.mxu0 0.0
    %104 = vmatpush1.msra.mxu0 %v75
    %105 = vmatprep.subr.mxu0 0.0
    %106 = vmatpush1.msra.mxu0 %v76
    %107 = vmatprep.subr.mxu0 0.0
    %108 = vmatpush1.msra.mxu0 %v77
    %109 = vmatprep.subr.mxu0 0.0
    %110 = vmatpush1.msra.mxu0 %v78
    %111 = vmatprep.subr.mxu0 0.0
    %112 = vmatpush1.msra.mxu0 %v79
    %113 = vmatprep.subr.mxu0 0.0
    %114 = vmatpush1.msra.mxu0 %v80
    %115 = vmatprep.subr.mxu0 0.0
    %116 = vmatpush1.msra.mxu0 0.0
    %117 = vmatprep.subr.mxu0 0.0
    %118 = vmatpush1.msra.mxu0 0.0
    %119 = vmatprep.subr.mxu0 0.0
    %120 = vmatpush1.msra.mxu0 0.0
    %121 = vmatprep.subr.mxu0 0.0
    %122 = vmatpush1.msra.mxu0 0.0
    %123 = vmatprep.subr.mxu0 0.0
    %124 = vmatpush1.msra.mxu0 0.0
    %125 = vmatprep.subr.mxu0 0.0
    %126 = vmatpush1.msra.mxu0 0.0
    %127 = vmatprep.subr.mxu0 0.0
    %128 = vmatpush1.msra.mxu0 0.0
    %129 = vmatprep.subr.mxu0 0.0
    %130 = vmatpush1.msra.mxu0 0.0
    %131 = vmatprep.subr.mxu0 0.0
    %132 = vmatpush1.msra.mxu0 0.0
    %133 = vmatprep.subr.mxu0 0.0
    %134 = vmatpush1.msra.mxu0 0.0
    %135 = vmatprep.subr.mxu0 0.0
    %136 = vmatpush1.msra.mxu0 0.0
    %137 = vmatprep.subr.mxu0 0.0
    %138 = vmatpush1.msra.mxu0 0.0
    %139 = vmatprep.subr.mxu0 0.0
    %140 = vmatpush1.msra.mxu0 0.0
    %141 = vmatprep.subr.mxu0 0.0
    %142 = vmatpush1.msra.mxu0 0.0
    %143 = vmatprep.subr.mxu0 0.0
    %144 = vmatpush1.msra.mxu0 0.0
    %145 = vmatprep.subr.mxu0 0.0
    %146 = vmatpush1.msra.mxu0 0.0
    %147 = vmatprep.mubr.f32.mxu0 0.0
    %v148 = vand.u32 %v81, 4294901760
    %v149 = vsub.f32 %v81, %v148
    %v150 = vand.u32 %v149, 4294901760
    %v151 = vsub.f32 %v149, %v150
    %v152 = vand.u32 %v151, 4294901760
    %153 = vmatmul.mubr.f32.gmra.mrb[0].mxu0 %v152
    %v154 = vpop.f32.mrb[0].mxu0
    %v155 = vadd.f32 1e-08, %v154
    %v156 = vpop.f32.mrb[0].mxu0
    %157 = vdwg.mxu0
    %158 = vmatprep.subr.mxu0 0.0
    %v159 = vsub.f32 %v65, %v65
    %v160 = vand.u32 %v159, 4294901760
    %v161 = vsub.f32 %v159, %v160
    %v162 = vand.u32 %v161, 4294901760
    %163 = vmatpush1.msra.mxu0 %v162
    %164 = vmatprep.subr.mxu0 0.0
    %v165 = vsub.f32 %v66, %v66
    %v166 = vand.u32 %v165, 4294901760
    %v167 = vsub.f32 %v165, %v166
    %v168 = vand.u32 %v167, 4294901760
    %169 = vmatpush1.msra.mxu0 %v168
    %170 = vmatprep.subr.mxu0 0.0
    %v171 = vsub.f32 %v67, %v67
    %v172 = vand.u32 %v171, 4294901760
    %v173 = vsub.f32 %v171, %v172
    %v174 = vand.u32 %v173, 4294901760
    %175 = vmatpush1.msra.mxu0 %v174
    %176 = vmatprep.subr.mxu0 0.0
    %v177 = vsub.f32 %v68, %v68
    %v178 = vand.u32 %v177, 4294901760
    %v179 = vsub.f32 %v177, %v178
    %v180 = vand.u32 %v179, 4294901760
    %181 = vmatpush1.msra.mxu0 %v180
    %182 = vmatprep.subr.mxu0 0.0
    %v183 = vsub.f32 %v69, %v69
    %v184 = vand.u32 %v183, 4294901760
    %v185 = vsub.f32 %v183, %v184
    %v186 = vand.u32 %v185, 4294901760
    %187 = vmatpush1.msra.mxu0 %v186
    %188 = vmatprep.subr.mxu0 0.0
    %v189 = vsub.f32 %v70, %v70
    %v190 = vand.u32 %v189, 4294901760
    %v191 = vsub.f32 %v189, %v190
    %v192 = vand.u32 %v191, 4294901760
    %193 = vmatpush1.msra.mxu0 %v192
    %194 = vmatprep.subr.mxu0 0.0
    %v195 = vsub.f32 %v71, %v71
    %v196 = vand.u32 %v195, 4294901760
    %v197 = vsub.f32 %v195, %v196
    %v198 = vand.u32 %v197, 4294901760
    %199 = vmatpush1.msra.mxu0 %v198
    %200 = vmatprep.subr.mxu0 0.0
    %v201 = vsub.f32 %v72, %v72
    %v202 = vand.u32 %v201, 4294901760
    %v203 = vsub.f32 %v201, %v202
    %v204 = vand.u32 %v203, 4294901760
    %205 = vmatpush1.msra.mxu0 %v204
    %206 = vmatprep.subr.mxu0 0.0
    %v207 = vsub.f32 %v73, %v73
    %v208 = vand.u32 %v207, 4294901760
    %v209 = vsub.f32 %v207, %v208
    %v210 = vand.u32 %v209, 4294901760
    %211 = vmatpush1.msra.mxu0 %v210
    %212 = vmatprep.subr.mxu0 0.0
    %v213 = vsub.f32 %v74, %v74
    %v214 = vand.u32 %v213, 4294901760
    %v215 = vsub.f32 %v213, %v214
    %v216 = vand.u32 %v215, 4294901760
    %217 = vmatpush1.msra.mxu0 %v216
    %218 = vmatprep.subr.mxu0 0.0
    %v219 = vsub.f32 %v75, %v75
    %v220 = vand.u32 %v219, 4294901760
    %v221 = vsub.f32 %v219, %v220
    %v222 = vand.u32 %v221, 4294901760
    %223 = vmatpush1.msra.mxu0 %v222
    %224 = vmatprep.subr.mxu0 0.0
    %v225 = vsub.f32 %v76, %v76
    %v226 = vand.u32 %v225, 4294901760
    %v227 = vsub.f32 %v225, %v226
    %v228 = vand.u32 %v227, 4294901760
    %229 = vmatpush1.msra.mxu0 %v228
    %230 = vmatprep.subr.mxu0 0.0
    %v231 = vsub.f32 %v77, %v77
    %v232 = vand.u32 %v231, 4294901760
    %v233 = vsub.f32 %v231, %v232
    %v234 = vand.u32 %v233, 4294901760
    %235 = vmatpush1.msra.mxu0 %v234
    %236 = vmatprep.subr.mxu0 0.0
    %v237 = vsub.f32 %v78, %v78
    %v238 = vand.u32 %v237, 4294901760
    %v239 = vsub.f32 %v237, %v238
    %v240 = vand.u32 %v239, 4294901760
    %241 = vmatpush1.msra.mxu0 %v240
    %242 = vmatprep.subr.mxu0 0.0
    %v243 = vsub.f32 %v79, %v79
    %v244 = vand.u32 %v243, 4294901760
    %v245 = vsub.f32 %v243, %v244
    %v246 = vand.u32 %v245, 4294901760
    %247 = vmatpush1.msra.mxu0 %v246
    %248 = vmatprep.subr.mxu0 0.0
    %v249 = vsub.f32 %v80, %v80
    %v250 = vand.u32 %v249, 4294901760
    %v251 = vsub.f32 %v249, %v250
    %v252 = vand.u32 %v251, 4294901760
    %253 = vmatpush1.msra.mxu0 %v252
    %254 = vmatprep.subr.mxu0 0.0
    %255 = vmatpush1.msra.mxu0 0.0
    %256 = vmatprep.subr.mxu0 0.0
    %257 = vmatpush1.msra.mxu0 0.0
    %258 = vmatprep.subr.mxu0 0.0
    %259 = vmatpush1.msra.mxu0 0.0
    %260 = vmatprep.subr.mxu0 0.0
    %261 = vmatpush1.msra.mxu0 0.0
    %262 = vmatprep.subr.mxu0 0.0
    %263 = vmatpush1.msra.mxu0 0.0
    %264 = vmatprep.subr.mxu0 0.0
    %265 = vmatpush1.msra.mxu0 0.0
    %266 = vmatprep.subr.mxu0 0.0
    %267 = vmatpush1.msra.mxu0 0.0
    %268 = vmatprep.subr.mxu0 0.0
    %269 = vmatpush1.msra.mxu0 0.0
    %270 = vmatprep.subr.mxu0 0.0
    %271 = vmatpush1.msra.mxu0 0.0
    %272 = vmatprep.subr.mxu0 0.0
    %273 = vmatpush1.msra.mxu0 0.0
    %274 = vmatprep.subr.mxu0 0.0
    %275 = vmatpush1.msra.mxu0 0.0
    %276 = vmatprep.subr.mxu0 0.0
    %277 = vmatpush1.msra.mxu0 0.0
    %278 = vmatprep.subr.mxu0 0.0
    %279 = vmatpush1.msra.mxu0 0.0
    %280 = vmatprep.subr.mxu0 0.0
    %281 = vmatpush1.msra.mxu0 0.0
    %282 = vmatprep.subr.mxu0 0.0
    %283 = vmatpush1.msra.mxu0 0.0
    %284 = vmatprep.subr.mxu0 0.0
    %285 = vmatpush1.msra.mxu0 0.0
    %286 = vmatprep.mubr.f32.mxu0 0.0
    %v287 = vand.u32 %v81, 4294901760
    %288 = vmatmul.mubr.f32.gmra.mrb[0].mxu0 %v287
    %v289 = vpop.f32.mrb[0].mxu0
    %v290 = vadd.f32 %v155, %v289
    %v291 = vpop.f32.mrb[0].mxu0
    %292 = vdwg.mxu0
    %293 = vmatprep.subr.mxu0 0.0
    %v294 = vsub.f32 %v65, %v65
    %295 = vmatpush1.msra.mxu0 %v294
    %296 = vmatprep.subr.mxu0 0.0
    %v297 = vsub.f32 %v66, %v66
    %298 = vmatpush1.msra.mxu0 %v297
    %299 = vmatprep.subr.mxu0 0.0
    %v300 = vsub.f32 %v67, %v67
    %301 = vmatpush1.msra.mxu0 %v300
    %302 = vmatprep.subr.mxu0 0.0
    %v303 = vsub.f32 %v68, %v68
    %304 = vmatpush1.msra.mxu0 %v303
    %305 = vmatprep.subr.mxu0 0.0
    %v306 = vsub.f32 %v69, %v69
    %307 = vmatpush1.msra.mxu0 %v306
    %308 = vmatprep.subr.mxu0 0.0
    %v309 = vsub.f32 %v70, %v70
    %310 = vmatpush1.msra.mxu0 %v309
    %311 = vmatprep.subr.mxu0 0.0
    %v312 = vsub.f32 %v71, %v71
    %313 = vmatpush1.msra.mxu0 %v312
    %314 = vmatprep.subr.mxu0 0.0
    %v315 = vsub.f32 %v72, %v72
    %316 = vmatpush1.msra.mxu0 %v315
    %317 = vmatprep.subr.mxu0 0.0
    %v318 = vsub.f32 %v73, %v73
    %319 = vmatpush1.msra.mxu0 %v318
    %320 = vmatprep.subr.mxu0 0.0
    %v321 = vsub.f32 %v74, %v74
    %322 = vmatpush1.msra.mxu0 %v321
    %323 = vmatprep.subr.mxu0 0.0
    %v324 = vsub.f32 %v75, %v75
    %325 = vmatpush1.msra.mxu0 %v324
    %326 = vmatprep.subr.mxu0 0.0
    %v327 = vsub.f32 %v76, %v76
    %328 = vmatpush1.msra.mxu0 %v327
    %329 = vmatprep.subr.mxu0 0.0
    %v330 = vsub.f32 %v77, %v77
    %331 = vmatpush1.msra.mxu0 %v330
    %332 = vmatprep.subr.mxu0 0.0
    %v333 = vsub.f32 %v78, %v78
    %334 = vmatpush1.msra.mxu0 %v333
    %335 = vmatprep.subr.mxu0 0.0
    %v336 = vsub.f32 %v79, %v79
    %337 = vmatpush1.msra.mxu0 %v336
    %338 = vmatprep.subr.mxu0 0.0
    %v339 = vsub.f32 %v80, %v80
    %340 = vmatpush1.msra.mxu0 %v339
    %341 = vmatprep.subr.mxu0 0.0
    %342 = vmatpush1.msra.mxu0 0.0
    %343 = vmatprep.subr.mxu0 0.0
    %344 = vmatpush1.msra.mxu0 0.0
    %345 = vmatprep.subr.mxu0 0.0
    %346 = vmatpush1.msra.mxu0 0.0
    %347 = vmatprep.subr.mxu0 0.0
    %348 = vmatpush1.msra.mxu0 0.0
    %349 = vmatprep.subr.mxu0 0.0
    %350 = vmatpush1.msra.mxu0 0.0
    %351 = vmatprep.subr.mxu0 0.0
    %352 = vmatpush1.msra.mxu0 0.0
    %353 = vmatprep.subr.mxu0 0.0
    %354 = vmatpush1.msra.mxu0 0.0
    %355 = vmatprep.subr.mxu0 0.0
    %356 = vmatpush1.msra.mxu0 0.0
    %357 = vmatprep.subr.mxu0 0.0
    %358 = vmatpush1.msra.mxu0 0.0
    %359 = vmatprep.subr.mxu0 0.0
    %360 = vmatpush1.msra.mxu0 0.0
    %361 = vmatprep.subr.mxu0 0.0
    %362 = vmatpush1.msra.mxu0 0.0
    %363 = vmatprep.subr.mxu0 0.0
    %364 = vmatpush1.msra.mxu0 0.0
    %365 = vmatprep.subr.mxu0 0.0
    %366 = vmatpush1.msra.mxu0 0.0
    %367 = vmatprep.subr.mxu0 0.0
    %368 = vmatpush1.msra.mxu0 0.0
    %369 = vmatprep.subr.mxu0 0.0
    %370 = vmatpush1.msra.mxu0 0.0
    %371 = vmatprep.subr.mxu0 0.0
    %372 = vmatpush1.msra.mxu0 0.0
    %373 = vmatprep.mubr.f32.mxu0 0.0
    %v374 = vand.u32 %v81, 4294901760
    %v375 = vsub.f32 %v81, %v374
    %376 = vmatmul.mubr.f32.gmra.mrb[0].mxu0 %v375
    %v377 = vpop.f32.mrb[0].mxu0
    %v378 = vadd.f32 %v290, %v377
    %v379 = vpop.f32.mrb[0].mxu0
    %380 = vdwg.mxu0
    %381 = vmatprep.subr.mxu0 0.0
    %382 = vmatpush1.msra.mxu0 %v65
    %383 = vmatprep.subr.mxu0 0.0
    %384 = vmatpush1.msra.mxu0 %v66
    %385 = vmatprep.subr.mxu0 0.0
    %386 = vmatpush1.msra.mxu0 %v67
    %387 = vmatprep.subr.mxu0 0.0
    %388 = vmatpush1.msra.mxu0 %v68
    %389 = vmatprep.subr.mxu0 0.0
    %390 = vmatpush1.msra.mxu0 %v69
    %391 = vmatprep.subr.mxu0 0.0
    %392 = vmatpush1.msra.mxu0 %v70
    %393 = vmatprep.subr.mxu0 0.0
    %394 = vmatpush1.msra.mxu0 %v71
    %395 = vmatprep.subr.mxu0 0.0
    %396 = vmatpush1.msra.mxu0 %v72
    %397 = vmatprep.subr.mxu0 0.0
    %398 = vmatpush1.msra.mxu0 %v73
    %399 = vmatprep.subr.mxu0 0.0
    %400 = vmatpush1.msra.mxu0 %v74
    %401 = vmatprep.subr.mxu0 0.0
    %402 = vmatpush1.msra.mxu0 %v75
    %403 = vmatprep.subr.mxu0 0.0
    %404 = vmatpush1.msra.mxu0 %v76
    %405 = vmatprep.subr.mxu0 0.0
    %406 = vmatpush1.msra.mxu0 %v77
    %407 = vmatprep.subr.mxu0 0.0
    %408 = vmatpush1.msra.mxu0 %v78
    %409 = vmatprep.subr.mxu0 0.0
    %410 = vmatpush1.msra.mxu0 %v79
    %411 = vmatprep.subr.mxu0 0.0
    %412 = vmatpush1.msra.mxu0 %v80
    %413 = vmatprep.subr.mxu0 0.0
    %414 = vmatpush1.msra.mxu0 0.0
    %415 = vmatprep.subr.mxu0 0.0
    %416 = vmatpush1.msra.mxu0 0.0
    %417 = vmatprep.subr.mxu0 0.0
    %418 = vmatpush1.msra.mxu0 0.0
    %419 = vmatprep.subr.mxu0 0.0
    %420 = vmatpush1.msra.mxu0 0.0
    %421 = vmatprep.subr.mxu0 0.0
    %422 = vmatpush1.msra.mxu0 0.0
    %423 = vmatprep.subr.mxu0 0.0
    %424 = vmatpush1.msra.mxu0 0.0
    %425 = vmatprep.subr.mxu0 0.0
    %426 = vmatpush1.msra.mxu0 0.0
    %427 = vmatprep.subr.mxu0 0.0
    %428 = vmatpush1.msra.mxu0 0.0
    %429 = vmatprep.subr.mxu0 0.0
    %430 = vmatpush1.msra.mxu0 0.0
    %431 = vmatprep.subr.mxu0 0.0
    %432 = vmatpush1.msra.mxu0 0.0
    %433 = vmatprep.subr.mxu0 0.0
    %434 = vmatpush1.msra.mxu0 0.0
    %435 = vmatprep.subr.mxu0 0.0
    %436 = vmatpush1.msra.mxu0 0.0
    %437 = vmatprep.subr.mxu0 0.0
    %438 = vmatpush1.msra.mxu0 0.0
    %439 = vmatprep.subr.mxu0 0.0
    %440 = vmatpush1.msra.mxu0 0.0
    %441 = vmatprep.subr.mxu0 0.0
    %442 = vmatpush1.msra.mxu0 0.0
    %443 = vmatprep.subr.mxu0 0.0
    %444 = vmatpush1.msra.mxu0 0.0
    %445 = vmatprep.mubr.f32.mxu0 0.0
    %v446 = vand.u32 %v81, 4294901760
    %v447 = vsub.f32 %v81, %v446
    %v448 = vand.u32 %v447, 4294901760
    %449 = vmatmul.mubr.f32.gmra.mrb[0].mxu0 %v448
    %v450 = vpop.f32.mrb[0].mxu0
    %v451 = vadd.f32 %v378, %v450
    %v452 = vpop.f32.mrb[0].mxu0
    %453 = vdwg.mxu0
    %454 = vmatprep.subr.mxu0 0.0
    %v455 = vsub.f32 %v65, %v65
    %v456 = vand.u32 %v455, 4294901760
    %457 = vmatpush1.msra.mxu0 %v456
    %458 = vmatprep.subr.mxu0 0.0
    %v459 = vsub.f32 %v66, %v66
    %v460 = vand.u32 %v459, 4294901760
    %461 = vmatpush1.msra.mxu0 %v460
    %462 = vmatprep.subr.mxu0 0.0
    %v463 = vsub.f32 %v67, %v67
    %v464 = vand.u32 %v463, 4294901760
    %465 = vmatpush1.msra.mxu0 %v464
    %466 = vmatprep.subr.mxu0 0.0
    %v467 = vsub.f32 %v68, %v68
    %v468 = vand.u32 %v467, 4294901760
    %469 = vmatpush1.msra.mxu0 %v468
    %470 = vmatprep.subr.mxu0 0.0
    %v471 = vsub.f32 %v69, %v69
    %v472 = vand.u32 %v471, 4294901760
    %473 = vmatpush1.msra.mxu0 %v472
    %474 = vmatprep.subr.mxu0 0.0
    %v475 = vsub.f32 %v70, %v70
    %v476 = vand.u32 %v475, 4294901760
    %477 = vmatpush1.msra.mxu0 %v476
    %478 = vmatprep.subr.mxu0 0.0
    %v479 = vsub.f32 %v71, %v71
    %v480 = vand.u32 %v479, 4294901760
    %481 = vmatpush1.msra.mxu0 %v480
    %482 = vmatprep.subr.mxu0 0.0
    %v483 = vsub.f32 %v72, %v72
    %v484 = vand.u32 %v483, 4294901760
    %485 = vmatpush1.msra.mxu0 %v484
    %486 = vmatprep.subr.mxu0 0.0
    %v487 = vsub.f32 %v73, %v73
    %v488 = vand.u32 %v487, 4294901760
    %489 = vmatpush1.msra.mxu0 %v488
    %490 = vmatprep.subr.mxu0 0.0
    %v491 = vsub.f32 %v74, %v74
    %v492 = vand.u32 %v491, 4294901760
    %493 = vmatpush1.msra.mxu0 %v492
    %494 = vmatprep.subr.mxu0 0.0
    %v495 = vsub.f32 %v75, %v75
    %v496 = vand.u32 %v495, 4294901760
    %497 = vmatpush1.msra.mxu0 %v496
    %498 = vmatprep.subr.mxu0 0.0
    %v499 = vsub.f32 %v76, %v76
    %v500 = vand.u32 %v499, 4294901760
    %501 = vmatpush1.msra.mxu0 %v500
    %502 = vmatprep.subr.mxu0 0.0
    %v503 = vsub.f32 %v77, %v77
    %v504 = vand.u32 %v503, 4294901760
    %505 = vmatpush1.msra.mxu0 %v504
    %506 = vmatprep.subr.mxu0 0.0
    %v507 = vsub.f32 %v78, %v78
    %v508 = vand.u32 %v507, 4294901760
    %509 = vmatpush1.msra.mxu0 %v508
    %510 = vmatprep.subr.mxu0 0.0
    %v511 = vsub.f32 %v79, %v79
    %v512 = vand.u32 %v511, 4294901760
    %513 = vmatpush1.msra.mxu0 %v512
    %514 = vmatprep.subr.mxu0 0.0
    %v515 = vsub.f32 %v80, %v80
    %v516 = vand.u32 %v515, 4294901760
    %517 = vmatpush1.msra.mxu0 %v516
    %518 = vmatprep.subr.mxu0 0.0
    %519 = vmatpush1.msra.mxu0 0.0
    %520 = vmatprep.subr.mxu0 0.0
    %521 = vmatpush1.msra.mxu0 0.0
    %522 = vmatprep.subr.mxu0 0.0
    %523 = vmatpush1.msra.mxu0 0.0
    %524 = vmatprep.subr.mxu0 0.0
    %525 = vmatpush1.msra.mxu0 0.0
    %526 = vmatprep.subr.mxu0 0.0
    %527 = vmatpush1.msra.mxu0 0.0
    %528 = vmatprep.subr.mxu0 0.0
    %529 = vmatpush1.msra.mxu0 0.0
    %530 = vmatprep.subr.mxu0 0.0
    %531 = vmatpush1.msra.mxu0 0.0
    %532 = vmatprep.subr.mxu0 0.0
    %533 = vmatpush1.msra.mxu0 0.0
    %534 = vmatprep.subr.mxu0 0.0
    %535 = vmatpush1.msra.mxu0 0.0
    %536 = vmatprep.subr.mxu0 0.0
    %537 = vmatpush1.msra.mxu0 0.0
    %538 = vmatprep.subr.mxu0 0.0
    %539 = vmatpush1.msra.mxu0 0.0
    %540 = vmatprep.subr.mxu0 0.0
    %541 = vmatpush1.msra.mxu0 0.0
    %542 = vmatprep.subr.mxu0 0.0
    %543 = vmatpush1.msra.mxu0 0.0
    %544 = vmatprep.subr.mxu0 0.0
    %545 = vmatpush1.msra.mxu0 0.0
    %546 = vmatprep.subr.mxu0 0.0
    %547 = vmatpush1.msra.mxu0 0.0
    %548 = vmatprep.subr.mxu0 0.0
    %549 = vmatpush1.msra.mxu0 0.0
    %550 = vmatprep.mubr.f32.mxu0 0.0
    %v551 = vand.u32 %v81, 4294901760
    %552 = vmatmul.mubr.f32.gmra.mrb[0].mxu0 %v551
    %v553 = vpop.f32.mrb[0].mxu0
    %v554 = vadd.f32 %v451, %v553
    %v555 = vpop.f32.mrb[0].mxu0
    %556 = vdwg.mxu0
    %557 = vmatprep.subr.mxu0 0.0
    %558 = vmatpush1.msra.mxu0 %v65
    %559 = vmatprep.subr.mxu0 0.0
    %560 = vmatpush1.msra.mxu0 %v66
    %561 = vmatprep.subr.mxu0 0.0
    %562 = vmatpush1.msra.mxu0 %v67
    %563 = vmatprep.subr.mxu0 0.0
    %564 = vmatpush1.msra.mxu0 %v68
    %565 = vmatprep.subr.mxu0 0.0
    %566 = vmatpush1.msra.mxu0 %v69
    %567 = vmatprep.subr.mxu0 0.0
    %568 = vmatpush1.msra.mxu0 %v70
    %569 = vmatprep.subr.mxu0 0.0
    %570 = vmatpush1.msra.mxu0 %v71
    %571 = vmatprep.subr.mxu0 0.0
    %572 = vmatpush1.msra.mxu0 %v72
    %573 = vmatprep.subr.mxu0 0.0
    %574 = vmatpush1.msra.mxu0 %v73
    %575 = vmatprep.subr.mxu0 0.0
    %576 = vmatpush1.msra.mxu0 %v74
    %577 = vmatprep.subr.mxu0 0.0
    %578 = vmatpush1.msra.mxu0 %v75
    %579 = vmatprep.subr.mxu0 0.0
    %580 = vmatpush1.msra.mxu0 %v76
    %581 = vmatprep.subr.mxu0 0.0
    %582 = vmatpush1.msra.mxu0 %v77
    %583 = vmatprep.subr.mxu0 0.0
    %584 = vmatpush1.msra.mxu0 %v78
    %585 = vmatprep.subr.mxu0 0.0
    %586 = vmatpush1.msra.mxu0 %v79
    %587 = vmatprep.subr.mxu0 0.0
    %588 = vmatpush1.msra.mxu0 %v80
    %589 = vmatprep.subr.mxu0 0.0
    %590 = vmatpush1.msra.mxu0 0.0
    %591 = vmatprep.subr.mxu0 0.0
    %592 = vmatpush1.msra.mxu0 0.0
    %593 = vmatprep.subr.mxu0 0.0
    %594 = vmatpush1.msra.mxu0 0.0
    %595 = vmatprep.subr.mxu0 0.0
    %596 = vmatpush1.msra.mxu0 0.0
    %597 = vmatprep.subr.mxu0 0.0
    %598 = vmatpush1.msra.mxu0 0.0
    %599 = vmatprep.subr.mxu0 0.0
    %600 = vmatpush1.msra.mxu0 0.0
    %601 = vmatprep.subr.mxu0 0.0
    %602 = vmatpush1.msra.mxu0 0.0
    %603 = vmatprep.subr.mxu0 0.0
    %604 = vmatpush1.msra.mxu0 0.0
    %605 = vmatprep.subr.mxu0 0.0
    %606 = vmatpush1.msra.mxu0 0.0
    %607 = vmatprep.subr.mxu0 0.0
    %608 = vmatpush1.msra.mxu0 0.0
    %609 = vmatprep.subr.mxu0 0.0
    %610 = vmatpush1.msra.mxu0 0.0
    %611 = vmatprep.subr.mxu0 0.0
    %612 = vmatpush1.msra.mxu0 0.0
    %613 = vmatprep.subr.mxu0 0.0
    %614 = vmatpush1.msra.mxu0 0.0
    %615 = vmatprep.subr.mxu0 0.0
    %616 = vmatpush1.msra.mxu0 0.0
    %617 = vmatprep.subr.mxu0 0.0
    %618 = vmatpush1.msra.mxu0 0.0
    %619 = vmatprep.subr.mxu0 0.0
    %620 = vmatpush1.msra.mxu0 0.0
    %621 = vmatprep.mubr.f32.mxu0 0.0
    %v622 = vand.u32 %v81, 4294901760
    %623 = vmatmul.mubr.f32.gmra.mrb[0].mxu0 %v622
    %v624 = vpop.f32.mrb[0].mxu0
    %v625 = vadd.f32 %v554, %v624
    %v626 = vpop.f32.mrb[0].mxu0
    %627 = vdwg.mxu0
    %v628 = vlog2.pop %v625
    %v629 = vmul.f32 %v628, 0.6931472
    %v630 = vsub.f32 %v82, %v629
    %v631 = vld [vmem:[%s2] sm:$0x1]
    %v632 = vmul.f32 %v630, %v631
    %633 = vst [vmem:[#allocation5] sm:$0x1] %v632
    // Predicated region
    $region18: #{tpu_custom_call.1} parent=1 // pred_check
      _
    $region19: #{tpu_custom_call.1} parent=1 // pred_check_branch
      %635 = sbr.rel (0) target = $region21
    $region20: #{tpu_custom_call.1} parent=1 // pred_region
      %s637 = ssub.s32 16, 16
      %638 = vsyncadd [#allocation4], %s637
      %s640 = sshll.u32 [#allocation5], 4
      %s641 = int_to_ptr.vmem [resolvable:$true] %s640
      %643 = dma.vmem_to_hbm [thread:$0]  %s641, 16, %s3, [#allocation4]
    $region21: #{tpu_custom_call.1} parent=1 // pred_fallthru
      _
    // Predicated region
    $region22: #{tpu_custom_call.1} parent=1 // pred_check
      _
    $region23: #{tpu_custom_call.1} parent=1 // pred_check_branch
      %645 = sbr.rel (0) target = $region25
    $region24: #{tpu_custom_call.1} parent=1 // pred_region
      %646 = dma.done [#allocation4], 16
    $region25: #{tpu_custom_call.1} parent=1 // pred_fallthru
      _
    %647 = vsyncpa [#allocation3], 1
    %648 = vsyncpa [#allocation4], 1

</llo_original>
